<compile_context>
chip_gen: v5e
topology: v5e:2x2
jax: 0.10.0
libtpu: 0.0.40
codegen_flags: <defaults>
</compile_context>

<pallas_src>
import jax
import jax.numpy as jnp
from jax import lax
from jax.experimental import pallas as pl
from jax.experimental.pallas import tpu as pltpu

LANES = 128          # vreg lane width (last dim)
SUBLANES = 8         # f32 vreg sublane depth
TILE_ROWS = 8192     # 8192*128*4B = 4 MiB f32 per input per block
CLAMP = -100.0       # PyTorch BCELoss clamps log terms at -100


def _make_bce_sum_kernel(tile_rows: int, steps_inner: int, rows_valid: int,
                         need_mask: bool):
    """Kernel closure over static tile geometry and true row count."""

    def kernel(pred_ref, tgt_ref, out_ref):
        p = pl.program_id(0)      # parallel slab (TensorCore on v7x)
        j = pl.program_id(1)      # reduction step inside the slab

        @pl.when(j == 0)
        def _():
            out_ref[...] = jnp.zeros_like(out_ref)

        x = pred_ref[...].astype(jnp.float32)
        t = tgt_ref[...].astype(jnp.float32)

        if need_mask:
            # Only emitted when the last block can be ragged / virtual grid
            # padding exists.  Neutral point p=1, t=1 gives exactly 0 loss
            # after the clamp, so padded (unspecified) data never poisons it.
            row = lax.broadcasted_iota(jnp.int32, (tile_rows, LANES), 0)
            global_row = (p * steps_inner + j) * tile_rows + row
            valid = global_row < rows_valid
            x = jnp.where(valid, x, 1.0)
            t = jnp.where(valid, t, 1.0)

        # clamp(log(.), min=-100) matches torch.nn.BCELoss semantics exactly.
        log_p = jnp.maximum(jnp.log(x), CLAMP)
        log_1mp = jnp.maximum(jnp.log(1.0 - x), CLAMP)
        loss = -(log_1mp + t * (log_p - log_1mp))   # == -(t*log_p + (1-t)*log_1mp)

        # VPU-only accumulation into the resident (1, 8, 128) output block.
        partial = loss.reshape(tile_rows // SUBLANES, SUBLANES, LANES).sum(axis=0)
        out_ref[...] += partial.reshape(1, SUBLANES, LANES)

    return kernel


def bce_loss(pred, target, *, tile_rows: int = TILE_ROWS, parallel_slabs: int = 2):
    """Mean BCE over all elements of pred/target (any matching shape)."""
    assert pred.shape == target.shape
    n = pred.size  # true element count (mean denominator), static

    # Flat, lane-dense view; keep HBM dtype (no wrapper upcast / full copy).
    p_flat = pred.reshape(-1)
    t_flat = target.reshape(-1)

    rem = n % LANES
    if rem:
        # Rare ragged-lane case (< 128 neutral elements appended so a
        # (rows, 128) view exists).  Neutral (p=1, t=1) contributes exactly 0.
        # TODO(synk): this concatenate materializes a full HBM copy; a fully
        # in-kernel lane mask would avoid it but needs a 1-D block layout path.
        pad = LANES - rem
        p_flat = jnp.concatenate([p_flat, jnp.ones((pad,), p_flat.dtype)])
        t_flat = jnp.concatenate([t_flat, jnp.ones((pad,), t_flat.dtype)])

    rows = p_flat.size // LANES
    p2d = p_flat.reshape(rows, LANES)
    t2d = t_flat.reshape(rows, LANES)

    # Dtype-aware sublane granularity: f32 -> 8, bf16/f16 -> 16, int8/fp8 -> 32.
    min_rows = SUBLANES
    for dt in (pred.dtype, target.dtype):
        itemsize = jnp.dtype(dt).itemsize
        min_rows = max(min_rows, {4: 8, 2: 16, 1: 32}.get(itemsize, 8))

    def _round_up(v, m):
        return ((v + m - 1) // m) * m

    # Don't allocate blocks far larger than the data; keep row multiples legal.
    tile_rows = max(min_rows,
                    min(_round_up(tile_rows, min_rows), _round_up(rows, min_rows)))

    blocks_total = pl.cdiv(rows, tile_rows)
    num_slabs = parallel_slabs if blocks_total >= parallel_slabs else 1
    steps_inner = pl.cdiv(blocks_total, num_slabs)
    need_mask = (num_slabs * steps_inner * tile_rows) != rows

    if need_mask:
        # Clamp block index for virtual-padding steps; those rows are fully
        # masked in-kernel so re-reading the last block contributes 0.
        def in_map(p, j):
            return (jnp.minimum(p * steps_inner + j, blocks_total - 1), 0)
    else:
        def in_map(p, j):
            return (p * steps_inner + j, 0)

    partials = pl.pallas_call(
        _make_bce_sum_kernel(tile_rows, steps_inner, rows, need_mask),
        out_shape=jax.ShapeDtypeStruct((num_slabs, SUBLANES, LANES), jnp.float32),
        grid_spec=pltpu.PrefetchScalarGridSpec(
            num_scalar_prefetch=0,
            grid=(num_slabs, steps_inner),
            in_specs=[
                pl.BlockSpec((tile_rows, LANES), in_map),
                pl.BlockSpec((tile_rows, LANES), in_map),
            ],
            # Same block index across the inner axis -> resident accumulator.
            out_specs=pl.BlockSpec((1, SUBLANES, LANES), lambda p, j: (p, 0, 0)),
        ),
        compiler_params=pltpu.CompilerParams(
            dimension_semantics=("parallel", "arbitrary"),
            vmem_limit_bytes=32 * 1024 * 1024,   # safe on v5e/v6e/v7x
        ),
    )(p2d, t2d)

    # Tiny (num_slabs, 8, 128) final reduce + mean in the wrapper.
    return (jnp.sum(partials) / jnp.float32(n)).astype(jnp.float32)


def _bce_ref(pred, target):
    """Pure-JAX reference with torch.nn.BCELoss clamp-at--100 semantics."""
    p = pred.astype(jnp.float32)
    t = target.astype(jnp.float32)
    log_p = jnp.maximum(jnp.log(p), -100.0)
    log_1mp = jnp.maximum(jnp.log(1.0 - p), -100.0)
    return jnp.mean(-(t * log_p + (1.0 - t) * log_1mp))


if __name__ == "__main__":
    key = jax.random.PRNGKey(0)
    k1, k2, k3, k4 = jax.random.split(key, 4)

    # Case 1: shapes the module implies — (B, C, H, W), mean over all elements.
    B, C, H, W = 2, 4, 16, 16
    pred1 = jax.nn.sigmoid(jax.random.normal(k1, (B, C, H, W), jnp.float32))
    target1 = (jax.random.uniform(k2, (B, C, H, W)) > 0.5).astype(jnp.float32)
    loss1 = bce_loss(pred1, target1)
    jax.block_until_ready(loss1)
    ref1 = _bce_ref(pred1, target1)
    assert jnp.allclose(loss1, ref1, rtol=1e-5, atol=1e-5), (loss1, ref1)

    # Case 2: ragged element count + tiny tile to exercise the lane-pad path,
    # the in-kernel row mask and the dual-slab (parallel) reduction path.
    pred2 = jax.nn.sigmoid(jax.random.normal(k3, (3, 5, 33, 17), jnp.float32))
    target2 = (jax.random.uniform(k4, (3, 5, 33, 17)) > 0.5).astype(jnp.float32)
    loss2 = bce_loss(pred2, target2, tile_rows=8)
    jax.block_until_ready(loss2)
    ref2 = _bce_ref(pred2, target2)
    assert jnp.allclose(loss2, ref2, rtol=1e-5, atol=1e-5), (loss2, ref2)

    print("KERNEL_OK")
</pallas_src>

<mosaic_0001>
module attributes {stable_mosaic.version = 11 : i64} {
  func.func @kernel(%arg0: i32, %arg1: i32, %arg2: memref<16x128xf32, #tpu.memory_space<vmem>>, %arg3: memref<16x128xf32, #tpu.memory_space<vmem>>, %arg4: memref<1x8x128xf32, #tpu.memory_space<vmem>>) attributes {dimension_semantics = [#tpu.dimension_semantics<parallel>, #tpu.dimension_semantics<arbitrary>], iteration_bounds = array<i64: 1, 1>, scalar_prefetch = 0 : i64, scratch_operands = 0 : i64, tpu.core_type = #tpu.core_type<tc>, window_params = [{transform_indices = @transform_0, window_bounds = array<i64: 16, 128>}, {transform_indices = @transform_1, window_bounds = array<i64: 16, 128>}, {transform_indices = @transform_2, window_bounds = array<i64: 1, 8, 128>}]} {
    %c0_i32 = arith.constant 0 : i32
    %0 = arith.cmpi eq, %arg1, %c0_i32 : i32
    %1 = arith.extui %0 : i1 to i32
    %c0_i32_0 = arith.constant 0 : i32
    %2 = arith.cmpi ne, %1, %c0_i32_0 : i32
    scf.if %2 {
      %cst_14 = arith.constant 0.000000e+00 : f32
      %24 = vector.broadcast %cst_14 : f32 to vector<1x8x128xf32>
      %c0_15 = arith.constant 0 : index
      %c0_16 = arith.constant 0 : index
      %c0_17 = arith.constant 0 : index
      %25 = vector.load %arg4[%c0_15, %c0_16, %c0_17] : memref<1x8x128xf32, #tpu.memory_space<vmem>>, vector<1x8x128xf32>
      tpu.vector_store %arg4[%c0_15, %c0_16, %c0_17], %24 {strides = array<i32>} : memref<1x8x128xf32, #tpu.memory_space<vmem>>, vector<1x8x128xf32>,
    } else {
    }
    %c0 = arith.constant 0 : index
    %c0_1 = arith.constant 0 : index
    %3 = vector.load %arg2[%c0, %c0_1] : memref<16x128xf32, #tpu.memory_space<vmem>>, vector<16x128xf32>
    %c0_2 = arith.constant 0 : index
    %c0_3 = arith.constant 0 : index
    %4 = vector.load %arg3[%c0_2, %c0_3] : memref<16x128xf32, #tpu.memory_space<vmem>>, vector<16x128xf32>
    %5 = math.log %3 : vector<16x128xf32>
    %cst = arith.constant -1.000000e+02 : f32
    %6 = vector.broadcast %cst : f32 to vector<16x128xf32>
    %7 = arith.maximumf %5, %6 : vector<16x128xf32>
    %cst_4 = arith.constant 1.000000e+00 : f32
    %8 = vector.broadcast %cst_4 : f32 to vector<16x128xf32>
    %9 = arith.subf %8, %3 : vector<16x128xf32>
    %10 = math.log %9 : vector<16x128xf32>
    %cst_5 = arith.constant -1.000000e+02 : f32
    %11 = vector.broadcast %cst_5 : f32 to vector<16x128xf32>
    %12 = arith.maximumf %10, %11 : vector<16x128xf32>
    %13 = arith.subf %7, %12 : vector<16x128xf32>
    %14 = arith.mulf %4, %13 : vector<16x128xf32>
    %15 = arith.addf %12, %14 : vector<16x128xf32>
    %cst_6 = arith.constant 0.000000e+00 : f32
    %16 = vector.broadcast %cst_6 : f32 to vector<16x128xf32>
    %17 = arith.subf %16, %15 : vector<16x128xf32>
    %18 = vector.shape_cast %17 : vector<16x128xf32> to vector<2x8x128xf32>
    %cst_7 = arith.constant dense<0.000000e+00> : vector<8x128xf32>
    %19 = vector.multi_reduction <add>, %18, %cst_7 [0] : vector<2x8x128xf32> to vector<8x128xf32>
    %c0_8 = arith.constant 0 : index
    %c0_9 = arith.constant 0 : index
    %c0_10 = arith.constant 0 : index
    %20 = vector.load %arg4[%c0_8, %c0_9, %c0_10] : memref<1x8x128xf32, #tpu.memory_space<vmem>>, vector<1x8x128xf32>
    %21 = vector.shape_cast %19 : vector<8x128xf32> to vector<1x8x128xf32>
    %22 = arith.addf %20, %21 : vector<1x8x128xf32>
    %c0_11 = arith.constant 0 : index
    %c0_12 = arith.constant 0 : index
    %c0_13 = arith.constant 0 : index
    %23 = vector.load %arg4[%c0_11, %c0_12, %c0_13] : memref<1x8x128xf32, #tpu.memory_space<vmem>>, vector<1x8x128xf32>
    tpu.vector_store %arg4[%c0_11, %c0_12, %c0_13], %22 {strides = array<i32>} : memref<1x8x128xf32, #tpu.memory_space<vmem>>, vector<1x8x128xf32>,
    return
  }
  func.func @transform_0(%arg0: i32, %arg1: i32) -> (i32, i32) {
    %c1_i32 = arith.constant 1 : i32
    %0 = arith.muli %arg0, %c1_i32 : i32
    %1 = arith.addi %0, %arg1 : i32
    %c0_i32 = arith.constant 0 : i32
    %c0_i32_0 = arith.constant 0 : i32
    return %1, %c0_i32 : i32, i32
  }
  func.func @transform_1(%arg0: i32, %arg1: i32) -> (i32, i32) {
    %c1_i32 = arith.constant 1 : i32
    %0 = arith.muli %arg0, %c1_i32 : i32
    %1 = arith.addi %0, %arg1 : i32
    %c0_i32 = arith.constant 0 : i32
    %c0_i32_0 = arith.constant 0 : i32
    return %1, %c0_i32 : i32, i32
  }
  func.func @transform_2(%arg0: i32, %arg1: i32) -> (i32, i32, i32) {
    %c0_i32 = arith.constant 0 : i32
    %c0_i32_0 = arith.constant 0 : i32
    %c0_i32_1 = arith.constant 0 : i32
    return %arg0, %c0_i32, %c0_i32_0 : i32, i32, i32
  }
}

</mosaic_0001>

<llo_original>
// kernel: tpu_custom_call.1
$region0: #{tpu_custom_call.1}
  #allocation0 [shape = 'u32[]', space=smem, size = 0x4, offset = 0x4, fixed_abs, tag = 'smem constant byte address 0x4 - core index']
  #allocation1 [shape = 'u32[72,128]{1,0:T(1,128)}', space=vmem, size = 0x9000, scoped, tag = 'internal scratch']
  %s0 = inlined_call_operand.hbm [shape: f32[16,128], index: 0, kind: input, shape index: {}]
  %s1 = inlined_call_operand.hbm [shape: f32[16,128], index: 1, kind: input, shape index: {}]
  %s2 = inlined_call_operand.hbm [shape: f32[1,8,128], index: 2, kind: output, shape index: {}]
  %s3 = sld [smem:[#allocation0]]
  $region30: #{tpu_custom_call.1} parent=0
    _
  %s5 = ssub.s32 1, %s3
  %s6 = scalar_select 0, %s5, %s3
  $region1: #{tpu_custom_call.1} parent=0
    #allocation2 [shape = 'u8[8192]{0}', space=vmem, size = 0x2000, scoped, tag = 'input window, operand 0, single buffered']
    #allocation3 [shape = 's32[1]{0}', space=sflag, size = 0x4, scoped, tag = 'scoped memory for tpu_custom_call.1']
    #allocation4 [shape = 's32[1]{0}', space=sflag, size = 0x4, scoped, tag = 'scoped memory for tpu_custom_call.1']
    #allocation5 [shape = 'u8[8192]{0}', space=vmem, size = 0x2000, scoped, tag = 'input window, operand 1, single buffered']
    #allocation6 [shape = 's32[1]{0}', space=sflag, size = 0x4, scoped, tag = 'scoped memory for tpu_custom_call.1']
    #allocation7 [shape = 'u8[4096]{0}', space=vmem, size = 0x1000, scoped, tag = 'output window, operand 0, single buffered']
    %7 = vsyncpa [#allocation3], 0
    %8 = vsyncpa [#allocation6], 0
    %9 = vsyncpa [#allocation4], 0
    // Predicated region
    $region2: #{tpu_custom_call.1} parent=1 // pred_check
      _
    $region3: #{tpu_custom_call.1} parent=1 // pred_check_branch
      %11 = sbr.rel (0) target = $region5
    $region4: #{tpu_custom_call.1} parent=1 // pred_region
      %s12 = sadd.s32 0, 0
      %s13 = smul.u32 2, %s12
      %15 = vsyncadd [#allocation3], 0
      %s16 = smul.addr %s13, 8
      %s17 = scalar_lea.hbm %s0, %s16
      %s18 = sshll.u32 %s17, 4
      %s19 = int_to_ptr.hbm [resolvable:$true] %s18
      %s20 = sshll.u32 [#allocation2], 4
      %s21 = int_to_ptr.vmem [resolvable:$true] %s20
      %26 = dma.hbm_to_vmem [thread:$0]  %s19, 256, %s21, [#allocation3], 128, 128, 8
    $region5: #{tpu_custom_call.1} parent=1 // pred_fallthru
      _
    // Predicated region
    $region6: #{tpu_custom_call.1} parent=1 // pred_check
      _
    $region7: #{tpu_custom_call.1} parent=1 // pred_check_branch
      %28 = sbr.rel (0) target = $region9
    $region8: #{tpu_custom_call.1} parent=1 // pred_region
      %s29 = sadd.s32 0, 0
      %s30 = smul.u32 2, %s29
      %32 = vsyncadd [#allocation6], 0
      %s33 = smul.addr %s30, 8
      %s34 = scalar_lea.hbm %s1, %s33
      %s35 = sshll.u32 %s34, 4
      %s36 = int_to_ptr.hbm [resolvable:$true] %s35
      %s37 = sshll.u32 [#allocation5], 4
      %s38 = int_to_ptr.vmem [resolvable:$true] %s37
      %43 = dma.hbm_to_vmem [thread:$0]  %s36, 256, %s38, [#allocation6], 128, 128, 8
    $region9: #{tpu_custom_call.1} parent=1 // pred_fallthru
      _
    // Predicated region
    $region10: #{tpu_custom_call.1} parent=1 // pred_check
      _
    $region11: #{tpu_custom_call.1} parent=1 // pred_check_branch
      %45 = sbr.rel (0) target = $region13
    $region12: #{tpu_custom_call.1} parent=1 // pred_region
      %47 = dma.done [#allocation3], 256
    $region13: #{tpu_custom_call.1} parent=1 // pred_fallthru
      _
    // Predicated region
    $region14: #{tpu_custom_call.1} parent=1 // pred_check
      _
    $region15: #{tpu_custom_call.1} parent=1 // pred_check_branch
      %49 = sbr.rel (0) target = $region17
    $region16: #{tpu_custom_call.1} parent=1 // pred_region
      %51 = dma.done [#allocation6], 256
    $region17: #{tpu_custom_call.1} parent=1 // pred_fallthru
      _
    %s52 = sadd.s32 0, 0
    %s53 = smul.u32 2, %s52
    %s54 = sadd.s32 0, 0
    %s55 = smul.u32 2, %s54
    %p56 = scmp.eq.s32.totalorder 0, 0
    // Predicated region
    $region18: #{tpu_custom_call.1} parent=1 // pred_check
      %p57 = pneg %p56
    $region19: #{tpu_custom_call.1} parent=1 // pred_check_branch
      %59 = sbr.rel (%p57) target = $region21
    $region20: #{tpu_custom_call.1} parent=1 // pred_region
      %60 = vst [vmem:[#allocation7] sm:$0xff] 0.0
    $region21: #{tpu_custom_call.1} parent=1 // pred_fallthru
      _
    %v61 = vld [vmem:[#allocation2] sm:$0xff]
    %v62 = vld [vmem:[#allocation2 + $0x8] sm:$0xff]
    %v63 = vld [vmem:[#allocation5] sm:$0xff]
    %v64 = vld [vmem:[#allocation5 + $0x8] sm:$0xff]
    %v65 = vlog2.pop %v61
    %v66 = vmul.f32 %v65, 0.6931472
    %v67 = vlog2.pop %v62
    %v68 = vmul.f32 %v67, 0.6931472
    %v69 = vmax.f32 %v66, -100.0
    %v70 = vmax.f32 %v68, -100.0
    %v71 = vsub.f32 1.0, %v61
    %v72 = vsub.f32 1.0, %v62
    %v73 = vlog2.pop %v71
    %v74 = vmul.f32 %v73, 0.6931472
    %v75 = vlog2.pop %v72
    %v76 = vmul.f32 %v75, 0.6931472
    %v77 = vmax.f32 %v74, -100.0
    %v78 = vmax.f32 %v76, -100.0
    %v79 = vsub.f32 %v69, %v77
    %v80 = vsub.f32 %v70, %v78
    %v81 = vmul.f32 %v63, %v79
    %v82 = vmul.f32 %v64, %v80
    %v83 = vadd.f32 %v77, %v81
    %v84 = vadd.f32 %v78, %v82
    %v85 = vsub.f32 0.0, %v83
    %v86 = vsub.f32 0.0, %v84
    %v87 = vadd.f32 %v85, %v86
    %v88 = vld [vmem:[#allocation7] sm:$0xff]
    %v89 = vadd.f32 %v88, %v87
    %90 = vst [vmem:[#allocation7] sm:$0xff] %v89
    // Predicated region
    $region22: #{tpu_custom_call.1} parent=1 // pred_check
      _
    $region23: #{tpu_custom_call.1} parent=1 // pred_check_branch
      %92 = sbr.rel (0) target = $region25
    $region24: #{tpu_custom_call.1} parent=1 // pred_region
      %94 = vsyncadd [#allocation4], 0
      %s96 = sshll.u32 [#allocation7], 4
      %s97 = int_to_ptr.vmem [resolvable:$true] %s96
      %s98 = sshll.u32 %s2, 4
      %s99 = int_to_ptr.hbm [resolvable:$true] %s98
      %101 = dma.vmem_to_hbm [thread:$0]  %s97, 128, %s99, [#allocation4]
    $region25: #{tpu_custom_call.1} parent=1 // pred_fallthru
      _
    // Predicated region
    $region26: #{tpu_custom_call.1} parent=1 // pred_check
      _
    $region27: #{tpu_custom_call.1} parent=1 // pred_check_branch
      %103 = sbr.rel (0) target = $region29
    $region28: #{tpu_custom_call.1} parent=1 // pred_region
      %105 = dma.done [#allocation4], 128
    $region29: #{tpu_custom_call.1} parent=1 // pred_fallthru
      _
    %106 = vsyncpa [#allocation3], 1
    %107 = vsyncpa [#allocation6], 1
    %108 = vsyncpa [#allocation4], 1

</llo_original>
